<compile_context>
chip_gen: v7x
topology: tpu7x:2x2x1
jax: 0.10.0
libtpu: 0.0.40
codegen_flags: <defaults>
</compile_context>

<pallas_src>
import jax
import jax.numpy as jnp
from jax.experimental import pallas as pl
from jax.experimental.pallas import tpu as pltpu


def mean_pool_kernel(h_ref, m_ref, o_ref, acc_ref, msum_ref):
    # h_ref:   (TB, TS, H)  block of last_hidden_state (native dtype)
    # m_ref:   (TB, TS)     block of attention_mask
    # o_ref:   (TB, H)      pooled output (float32), resident across the seq axis
    # acc_ref: (TB, H) f32  running masked embedding sum (VMEM scratch)
    # msum_ref:(TB, 1) f32  running mask sum (VMEM scratch)
    k = pl.program_id(1)

    @pl.when(k == 0)
    def _init():
        acc_ref[...] = jnp.zeros_like(acc_ref)
        msum_ref[...] = jnp.zeros_like(msum_ref)

    h = h_ref[...]                                  # keep native dtype (bf16/f32)
    m = m_ref[...].astype(h.dtype)                  # (TB, TS)

    # Masked sum over this sequence tile as a batched mat-vec on the MXU:
    # (TB, 1, TS) @ (TB, TS, H) -> (TB, 1, H), accumulated in float32.
    part = jnp.einsum(
        "bqs,bsh->bqh", m[:, None, :], h, preferred_element_type=jnp.float32
    )
    acc_ref[...] += part[:, 0, :]
    msum_ref[...] += jnp.sum(
        m_ref[...].astype(jnp.float32), axis=1, keepdims=True
    )

    @pl.when(k == pl.num_programs(1) - 1)
    def _finalize():
        denom = jnp.maximum(msum_ref[...], 1e-9)    # torch.clamp(min=1e-9)
        o_ref[...] = (acc_ref[...] / denom).astype(o_ref.dtype)


def _pick_batch_tile(B: int) -> int:
    # Prefer 8 sublanes; otherwise fall back to the full batch extent so the
    # block equals the array dim (satisfies the (8,128) BlockSpec rule).
    return 8 if B % 8 == 0 else B


def _pick_seq_tile(S: int, TB: int, H: int, itemsize: int,
                   target_bytes: int = 4 * 1024 * 1024, max_rows: int = 512) -> int:
    # Keep the h block a few MiB so 2 inputs x 2 pipeline buffers stay well
    # under scoped VMEM on every generation (incl. v7x's 64 MiB physical VMEM).
    budget_rows = max(8, target_bytes // max(1, TB * H * itemsize))
    target = int(min(max_rows, budget_rows))
    if S <= target:
        return S
    for t in range(target, 7, -1):
        if S % t == 0 and t % 8 == 0:
            return t
    return S  # fallback: full sequence in one block


def mean_pooling(last_hidden_state: jax.Array, attention_mask: jax.Array) -> jax.Array:
    B, S, H = last_hidden_state.shape
    assert attention_mask.shape == (B, S)

    itemsize = jnp.dtype(last_hidden_state.dtype).itemsize
    TB = _pick_batch_tile(B)
    TS = _pick_seq_tile(S, TB, H, itemsize)
    assert B % TB == 0 and S % TS == 0

    cost = pl.CostEstimate(
        flops=2 * B * S * H,
        bytes_accessed=B * S * H * itemsize
        + B * S * jnp.dtype(attention_mask.dtype).itemsize
        + B * H * 4,
        transcendentals=0,
    )

    return pl.pallas_call(
        mean_pool_kernel,
        # Output is float32, mirroring torch promotion (mask.float() * hidden).
        out_shape=jax.ShapeDtypeStruct((B, H), jnp.float32),
        grid_spec=pltpu.PrefetchScalarGridSpec(
            num_scalar_prefetch=0,
            grid=(B // TB, S // TS),
            in_specs=[
                pl.BlockSpec((TB, TS, H), lambda b, k: (b, k, 0)),
                pl.BlockSpec((TB, TS), lambda b, k: (b, k)),
            ],
            out_specs=pl.BlockSpec((TB, H), lambda b, k: (b, 0)),
            scratch_shapes=[
                pltpu.VMEM((TB, H), jnp.float32),
                pltpu.VMEM((TB, 1), jnp.float32),
            ],
        ),
        compiler_params=pltpu.CompilerParams(
            dimension_semantics=("parallel", "arbitrary"),
        ),
        cost_estimate=cost,
    )(last_hidden_state, attention_mask)


def mean_pooling_ref(last_hidden_state, attention_mask):
    # Pure-JAX reference mirroring the PyTorch forward.
    mask = attention_mask[..., None].astype(jnp.float32)
    mask = jnp.broadcast_to(mask, last_hidden_state.shape)
    sum_emb = jnp.sum(last_hidden_state.astype(jnp.float32) * mask, axis=1)
    sum_mask = jnp.maximum(jnp.sum(mask, axis=1), 1e-9)
    return sum_emb / sum_mask


if __name__ == "__main__":
    B, S, H = 2, 8, 32
    key = jax.random.PRNGKey(0)
    k1, k2 = jax.random.split(key)
    last_hidden_state = jax.random.normal(k1, (B, S, H), dtype=jnp.float32)
    # integer 0/1 attention mask, as typical for transformer inputs
    attention_mask = (jax.random.uniform(k2, (B, S)) > 0.3).astype(jnp.int32)

    out = mean_pooling(last_hidden_state, attention_mask)
    out = jax.block_until_ready(out)

    ref = mean_pooling_ref(last_hidden_state, attention_mask)
    assert out.shape == (B, H)
    assert jnp.allclose(out, ref, atol=1e-5, rtol=1e-5)

    print("KERNEL_OK")
</pallas_src>

<mosaic_0001>
module attributes {stable_mosaic.version = 11 : i64} {
  func.func @mean_pool_kernel(%arg0: i32, %arg1: i32, %arg2: memref<2x8x32xf32, #tpu.memory_space<vmem>>, %arg3: memref<2x8xi32, #tpu.memory_space<vmem>>, %arg4: memref<2x32xf32, #tpu.memory_space<vmem>>, %arg5: memref<2x32xf32, #tpu.memory_space<vmem>>, %arg6: memref<2x1xf32, #tpu.memory_space<vmem>>) attributes {dimension_semantics = [#tpu.dimension_semantics<parallel>, #tpu.dimension_semantics<arbitrary>], iteration_bounds = array<i64: 1, 1>, scalar_prefetch = 0 : i64, scratch_operands = 2 : i64, tpu.core_type = #tpu.core_type<tc>, window_params = [{transform_indices = @transform_0, window_bounds = array<i64: 2, 8, 32>}, {transform_indices = @transform_1, window_bounds = array<i64: 2, 8>}, {transform_indices = @transform_2, window_bounds = array<i64: 2, 32>}]} {
    %c0_i32 = arith.constant 0 : i32
    %0 = arith.cmpi eq, %arg1, %c0_i32 : i32
    %1 = arith.extui %0 : i1 to i32
    %c0_i32_0 = arith.constant 0 : i32
    %2 = arith.cmpi ne, %1, %c0_i32_0 : i32
    scf.if %2 {
      %cst_18 = arith.constant 0.000000e+00 : f32
      %22 = vector.broadcast %cst_18 : f32 to vector<2x32xf32>
      %c0_19 = arith.constant 0 : index
      %c0_20 = arith.constant 0 : index
      %23 = vector.load %arg5[%c0_19, %c0_20] : memref<2x32xf32, #tpu.memory_space<vmem>>, vector<2x32xf32>
      tpu.vector_store %arg5[%c0_19, %c0_20], %22 {strides = array<i32>} : memref<2x32xf32, #tpu.memory_space<vmem>>, vector<2x32xf32>,
      %cst_21 = arith.constant 0.000000e+00 : f32
      %24 = vector.broadcast %cst_21 : f32 to vector<2x1xf32>
      %c0_22 = arith.constant 0 : index
      %c0_23 = arith.constant 0 : index
      %25 = vector.load %arg6[%c0_22, %c0_23] : memref<2x1xf32, #tpu.memory_space<vmem>>, vector<2x1xf32>
      tpu.vector_store %arg6[%c0_22, %c0_23], %24 {strides = array<i32>} : memref<2x1xf32, #tpu.memory_space<vmem>>, vector<2x1xf32>,
    } else {
    }
    %c0 = arith.constant 0 : index
    %c0_1 = arith.constant 0 : index
    %c0_2 = arith.constant 0 : index
    %3 = vector.load %arg2[%c0, %c0_1, %c0_2] : memref<2x8x32xf32, #tpu.memory_space<vmem>>, vector<2x8x32xf32>
    %c0_3 = arith.constant 0 : index
    %c0_4 = arith.constant 0 : index
    %4 = vector.load %arg3[%c0_3, %c0_4] : memref<2x8xi32, #tpu.memory_space<vmem>>, vector<2x8xi32>
    %5 = arith.sitofp %4 : vector<2x8xi32> to vector<2x8xf32>
    %6 = vector.shape_cast %5 : vector<2x8xf32> to vector<2x1x8xf32>
    "tpu.trace_start"() <{level = 10 : i32, message = "bqs,bsh->bqh"}> : () -> ()
    %cst = arith.constant dense<0.000000e+00> : vector<2x1x32xf32>
    %7 = tpu.matmul %6, %3, %cst {dimension_numbers = #tpu.dot_dimension_numbers<[2], [1], [1], [2], [0, 0, 0, 1, 1, 2], [0], [0]>} : vector<2x1x8xf32>, vector<2x8x32xf32>, vector<2x1x32xf32> -> vector<2x1x32xf32>
    "tpu.trace_stop"() : () -> ()
    %c0_5 = arith.constant 0 : index
    %c0_6 = arith.constant 0 : index
    %8 = vector.load %arg5[%c0_5, %c0_6] : memref<2x32xf32, #tpu.memory_space<vmem>>, vector<2x32xf32>
    %9 = vector.shape_cast %7 : vector<2x1x32xf32> to vector<2x32xf32>
    %10 = arith.addf %8, %9 : vector<2x32xf32>
    %c0_7 = arith.constant 0 : index
    %c0_8 = arith.constant 0 : index
    %11 = vector.load %arg5[%c0_7, %c0_8] : memref<2x32xf32, #tpu.memory_space<vmem>>, vector<2x32xf32>
    tpu.vector_store %arg5[%c0_7, %c0_8], %10 {strides = array<i32>} : memref<2x32xf32, #tpu.memory_space<vmem>>, vector<2x32xf32>,
    %c0_9 = arith.constant 0 : index
    %c0_10 = arith.constant 0 : index
    %12 = vector.load %arg6[%c0_9, %c0_10] : memref<2x1xf32, #tpu.memory_space<vmem>>, vector<2x1xf32>
    %c0_11 = arith.constant 0 : index
    %c0_12 = arith.constant 0 : index
    %13 = vector.load %arg3[%c0_11, %c0_12] : memref<2x8xi32, #tpu.memory_space<vmem>>, vector<2x8xi32>
    %14 = arith.sitofp %13 : vector<2x8xi32> to vector<2x8xf32>
    %cst_13 = arith.constant dense<0.000000e+00> : vector<2xf32>
    %15 = vector.multi_reduction <add>, %14, %cst_13 [1] : vector<2x8xf32> to vector<2xf32>
    %16 = vector.shape_cast %15 : vector<2xf32> to vector<2x1xf32>
    %17 = arith.addf %12, %16 : vector<2x1xf32>
    %c0_14 = arith.constant 0 : index
    %c0_15 = arith.constant 0 : index
    %18 = vector.load %arg6[%c0_14, %c0_15] : memref<2x1xf32, #tpu.memory_space<vmem>>, vector<2x1xf32>
    tpu.vector_store %arg6[%c0_14, %c0_15], %17 {strides = array<i32>} : memref<2x1xf32, #tpu.memory_space<vmem>>, vector<2x1xf32>,
    %c0_i32_16 = arith.constant 0 : i32
    %19 = arith.cmpi eq, %arg1, %c0_i32_16 : i32
    %20 = arith.extui %19 : i1 to i32
    %c0_i32_17 = arith.constant 0 : i32
    %21 = arith.cmpi ne, %20, %c0_i32_17 : i32
    scf.if %21 {
      %c0_18 = arith.constant 0 : index
      %c0_19 = arith.constant 0 : index
      %22 = vector.load %arg6[%c0_18, %c0_19] : memref<2x1xf32, #tpu.memory_space<vmem>>, vector<2x1xf32>
      %cst_20 = arith.constant 9.99999971E-10 : f32
      %23 = vector.broadcast %cst_20 : f32 to vector<2x1xf32>
      %24 = arith.maximumf %22, %23 : vector<2x1xf32>
      %c0_21 = arith.constant 0 : index
      %c0_22 = arith.constant 0 : index
      %25 = vector.load %arg5[%c0_21, %c0_22] : memref<2x32xf32, #tpu.memory_space<vmem>>, vector<2x32xf32>
      %26 = vector.broadcast %24 : vector<2x1xf32> to vector<2x32xf32>
      %27 = arith.divf %25, %26 : vector<2x32xf32>
      %c0_23 = arith.constant 0 : index
      %c0_24 = arith.constant 0 : index
      %28 = vector.load %arg4[%c0_23, %c0_24] : memref<2x32xf32, #tpu.memory_space<vmem>>, vector<2x32xf32>
      tpu.vector_store %arg4[%c0_23, %c0_24], %27 {strides = array<i32>} : memref<2x32xf32, #tpu.memory_space<vmem>>, vector<2x32xf32>,
    } else {
    }
    return
  }
  func.func @transform_0(%arg0: i32, %arg1: i32) -> (i32, i32, i32) {
    %c0_i32 = arith.constant 0 : i32
    %c0_i32_0 = arith.constant 0 : i32
    return %arg0, %arg1, %c0_i32 : i32, i32, i32
  }
  func.func @transform_1(%arg0: i32, %arg1: i32) -> (i32, i32) {
    %c0_i32 = arith.constant 0 : i32
    return %arg0, %arg1 : i32, i32
  }
  func.func @transform_2(%arg0: i32, %arg1: i32) -> (i32, i32) {
    %c0_i32 = arith.constant 0 : i32
    %c0_i32_0 = arith.constant 0 : i32
    return %arg0, %c0_i32 : i32, i32
  }
}

</mosaic_0001>

<llo_original>
// kernel: tpu_custom_call.1
$region0: #{tpu_custom_call.1}
  #allocation0 [shape = 'u32[]', space=smem, size = 0x4, offset = 0x4, fixed_abs, tag = 'smem constant byte address 0x4 - core index']
  #allocation1 [shape = 'u32[144,128]{1,0:T(1,128)}', space=vmem, size = 0x12000, scoped, tag = 'internal scratch']
  #allocation2 [shape = 'f32[2,32]{1,0:T(2,128)}', space=vmem, size = 0x400, scoped, tag = 'scratch operand']
  #allocation3 [shape = 'f32[2,1]{1,0:T(2,128)}', space=vmem, size = 0x400, scoped, tag = 'scratch operand']
  %s0 = inlined_call_operand.hbm [shape: f32[2,8,32], index: 0, kind: input, shape index: {}]
  %s1 = inlined_call_operand.vmem [shape: s32[2,8], index: 1, kind: input, shape index: {}]
  %s2 = inlined_call_operand.hbm [shape: f32[2,32], index: 2, kind: output, shape index: {}]
  %s3 = sld [smem:[#allocation0]]
  $region30: #{tpu_custom_call.1} parent=0
    _
  %s5 = ssub.s32 1, %s3
  %s6 = scalar_select 0, %s5, %s3
  $region1: #{tpu_custom_call.1} parent=0
    #allocation4 [shape = 'u8[8192]{0}', space=vmem, size = 0x2000, scoped, tag = 'input window, operand 0, single buffered']
    #allocation5 [shape = 's32[1]{0}', space=sflag, size = 0x4, scoped, tag = 'scoped memory for tpu_custom_call.1']
    #allocation6 [shape = 's32[1]{0}', space=sflag, size = 0x4, scoped, tag = 'scoped memory for tpu_custom_call.1']
    #allocation7 [shape = 'u8[1024]{0}', space=vmem, size = 0x400, scoped, tag = 'output window, operand 0, single buffered']
    %7 = vsyncpa [#allocation5], 0
    %8 = vsyncpa [#allocation6], 0
    // Predicated region
    $region2: #{tpu_custom_call.1} parent=1 // pred_check
      _
    $region3: #{tpu_custom_call.1} parent=1 // pred_check_branch
      %10 = sbr.rel (0) target = $region5
    $region4: #{tpu_custom_call.1} parent=1 // pred_region
      %s12 = ssub.s32 256, 256
      %13 = vsyncadd [#allocation5], %s12
      %s14 = sshll.u32 [#allocation4], 4
      %s15 = int_to_ptr.vmem [resolvable:$true] %s14
      %20 = dma.hbm_to_vmem [thread:$0]  %s0, 256, %s15, [#allocation5], 128, 128, 8
    $region5: #{tpu_custom_call.1} parent=1 // pred_fallthru
      _
    // Predicated region
    $region6: #{tpu_custom_call.1} parent=1 // pred_check
      _
    $region7: #{tpu_custom_call.1} parent=1 // pred_check_branch
      %22 = sbr.rel (0) target = $region9
    $region8: #{tpu_custom_call.1} parent=1 // pred_region
      _
    $region9: #{tpu_custom_call.1} parent=1 // pred_fallthru
      _
    // Predicated region
    $region10: #{tpu_custom_call.1} parent=1 // pred_check
      _
    $region11: #{tpu_custom_call.1} parent=1 // pred_check_branch
      %24 = sbr.rel (0) target = $region13
    $region12: #{tpu_custom_call.1} parent=1 // pred_region
      %25 = dma.done [#allocation5], 256
    $region13: #{tpu_custom_call.1} parent=1 // pred_fallthru
      _
    %p26 = scmp.eq.s32.totalorder 0, 0
    // Predicated region
    $region14: #{tpu_custom_call.1} parent=1 // pred_check
      %p27 = pneg %p26
    $region15: #{tpu_custom_call.1} parent=1 // pred_check_branch
      %29 = sbr.rel (%p27) target = $region17
    $region16: #{tpu_custom_call.1} parent=1 // pred_region
      %vm30 = vcmask 254976
      %31 = vst.msk [vmem:[#allocation2] sm:$0x3] %vm30, 0.0
      %vm32 = vcmask 1024
      %33 = vst.msk [vmem:[#allocation3] sm:$0x3] %vm32, 0.0
    $region17: #{tpu_custom_call.1} parent=1 // pred_fallthru
      _
    %v34 = vld [vmem:[#allocation4] sm:$0xff]
    %v35 = vld [vmem:[#allocation4 + $0x8] sm:$0xff]
    %v36 = vld [vmem:[%s1] sm:$0x3]
    %v37 = vcvt.s32.f32 %v36
    %v40 = vunpack.c.l.s4 1966171168
    %v41 = vunpack.c.0.s8 %v40
    %v42 = vlaneseq
    %v43 = vshrl.u32 %v42, 7
    %v44 = vsub.s32 %v41, %v43
    %v45 = vrot.slane %v37, %v44
    %v46 = vcombine.high %v45, %v45
    %v48 = vunpack.c.l.s4 1966171168
    %v49 = vunpack.c.0.s8 %v48
    %v50 = vlaneseq
    %v51 = vshrl.u32 %v50, 7
    %v52 = vsub.s32 %v49, %v51
    %v53 = vrot.slane %v45, %v52
    %v55 = vunpack.c.l.s4 1966171168
    %v56 = vunpack.c.0.s8 %v55
    %v57 = vlaneseq
    %v58 = vshrl.u32 %v57, 7
    %v59 = vsub.s32 %v56, %v58
    %v60 = vrot.slane %v46, %v59
    %vm61 = vcmask 64512
    %v62 = vsel %vm61, %v53, 0
    %64 = vmatprep.subr.mxu0 0.0
    %65 = vmatpush1.msra.mxu0 %v34
    %66 = vmatprep.subr.mxu0 0.0
    %67 = vmatpush1.msra.mxu0 0.0
    %68 = vmatprep.subr.mxu0 0.0
    %69 = vmatpush1.msra.mxu0 0.0
    %70 = vmatprep.subr.mxu0 0.0
    %71 = vmatpush1.msra.mxu0 0.0
    %72 = vmatprep.subr.mxu0 0.0
    %73 = vmatpush1.msra.mxu0 0.0
    %74 = vmatprep.subr.mxu0 0.0
    %75 = vmatpush1.msra.mxu0 0.0
    %76 = vmatprep.subr.mxu0 0.0
    %77 = vmatpush1.msra.mxu0 0.0
    %78 = vmatprep.subr.mxu0 0.0
    %79 = vmatpush1.msra.mxu0 0.0
    %80 = vmatprep.subr.mxu0 0.0
    %81 = vmatpush1.msra.mxu0 0.0
    %82 = vmatprep.subr.mxu0 0.0
    %83 = vmatpush1.msra.mxu0 0.0
    %84 = vmatprep.subr.mxu0 0.0
    %85 = vmatpush1.msra.mxu0 0.0
    %86 = vmatprep.subr.mxu0 0.0
    %87 = vmatpush1.msra.mxu0 0.0
    %88 = vmatprep.subr.mxu0 0.0
    %89 = vmatpush1.msra.mxu0 0.0
    %90 = vmatprep.subr.mxu0 0.0
    %91 = vmatpush1.msra.mxu0 0.0
    %92 = vmatprep.subr.mxu0 0.0
    %93 = vmatpush1.msra.mxu0 0.0
    %94 = vmatprep.subr.mxu0 0.0
    %95 = vmatpush1.msra.mxu0 0.0
    %96 = vmatprep.subr.mxu0 0.0
    %97 = vmatpush1.msra.mxu0 0.0
    %98 = vmatprep.subr.mxu0 0.0
    %99 = vmatpush1.msra.mxu0 0.0
    %100 = vmatprep.subr.mxu0 0.0
    %101 = vmatpush1.msra.mxu0 0.0
    %102 = vmatprep.subr.mxu0 0.0
    %103 = vmatpush1.msra.mxu0 0.0
    %104 = vmatprep.subr.mxu0 0.0
    %105 = vmatpush1.msra.mxu0 0.0
    %106 = vmatprep.subr.mxu0 0.0
    %107 = vmatpush1.msra.mxu0 0.0
    %108 = vmatprep.subr.mxu0 0.0
    %109 = vmatpush1.msra.mxu0 0.0
    %110 = vmatprep.subr.mxu0 0.0
    %111 = vmatpush1.msra.mxu0 0.0
    %112 = vmatprep.subr.mxu0 0.0
    %113 = vmatpush1.msra.mxu0 0.0
    %114 = vmatprep.subr.mxu0 0.0
    %115 = vmatpush1.msra.mxu0 0.0
    %116 = vmatprep.subr.mxu0 0.0
    %117 = vmatpush1.msra.mxu0 0.0
    %118 = vmatprep.subr.mxu0 0.0
    %119 = vmatpush1.msra.mxu0 0.0
    %120 = vmatprep.subr.mxu0 0.0
    %121 = vmatpush1.msra.mxu0 0.0
    %122 = vmatprep.subr.mxu0 0.0
    %123 = vmatpush1.msra.mxu0 0.0
    %124 = vmatprep.subr.mxu0 0.0
    %125 = vmatpush1.msra.mxu0 0.0
    %126 = vmatprep.subr.mxu0 0.0
    %127 = vmatpush1.msra.mxu0 0.0
    %128 = vmatprep.mubr.f32.mxu0 0.0
    %129 = vmatmul.mubr.f32.gmra.mrb[0].mxu0 %v62
    %v130 = vpop.f32.mrb[0].mxu0
    %v131 = vadd.f32 0.0, %v130
    %v132 = vpop.f32.mrb[0].mxu0
    %133 = vdwg.mxu0
    %v134 = vsel %vm61, %v60, 0
    %136 = vmatprep.subr.mxu0 0.0
    %137 = vmatpush1.msra.mxu0 %v35
    %138 = vmatprep.subr.mxu0 0.0
    %139 = vmatpush1.msra.mxu0 0.0
    %140 = vmatprep.subr.mxu0 0.0
    %141 = vmatpush1.msra.mxu0 0.0
    %142 = vmatprep.subr.mxu0 0.0
    %143 = vmatpush1.msra.mxu0 0.0
    %144 = vmatprep.subr.mxu0 0.0
    %145 = vmatpush1.msra.mxu0 0.0
    %146 = vmatprep.subr.mxu0 0.0
    %147 = vmatpush1.msra.mxu0 0.0
    %148 = vmatprep.subr.mxu0 0.0
    %149 = vmatpush1.msra.mxu0 0.0
    %150 = vmatprep.subr.mxu0 0.0
    %151 = vmatpush1.msra.mxu0 0.0
    %152 = vmatprep.subr.mxu0 0.0
    %153 = vmatpush1.msra.mxu0 0.0
    %154 = vmatprep.subr.mxu0 0.0
    %155 = vmatpush1.msra.mxu0 0.0
    %156 = vmatprep.subr.mxu0 0.0
    %157 = vmatpush1.msra.mxu0 0.0
    %158 = vmatprep.subr.mxu0 0.0
    %159 = vmatpush1.msra.mxu0 0.0
    %160 = vmatprep.subr.mxu0 0.0
    %161 = vmatpush1.msra.mxu0 0.0
    %162 = vmatprep.subr.mxu0 0.0
    %163 = vmatpush1.msra.mxu0 0.0
    %164 = vmatprep.subr.mxu0 0.0
    %165 = vmatpush1.msra.mxu0 0.0
    %166 = vmatprep.subr.mxu0 0.0
    %167 = vmatpush1.msra.mxu0 0.0
    %168 = vmatprep.subr.mxu0 0.0
    %169 = vmatpush1.msra.mxu0 0.0
    %170 = vmatprep.subr.mxu0 0.0
    %171 = vmatpush1.msra.mxu0 0.0
    %172 = vmatprep.subr.mxu0 0.0
    %173 = vmatpush1.msra.mxu0 0.0
    %174 = vmatprep.subr.mxu0 0.0
    %175 = vmatpush1.msra.mxu0 0.0
    %176 = vmatprep.subr.mxu0 0.0
    %177 = vmatpush1.msra.mxu0 0.0
    %178 = vmatprep.subr.mxu0 0.0
    %179 = vmatpush1.msra.mxu0 0.0
    %180 = vmatprep.subr.mxu0 0.0
    %181 = vmatpush1.msra.mxu0 0.0
    %182 = vmatprep.subr.mxu0 0.0
    %183 = vmatpush1.msra.mxu0 0.0
    %184 = vmatprep.subr.mxu0 0.0
    %185 = vmatpush1.msra.mxu0 0.0
    %186 = vmatprep.subr.mxu0 0.0
    %187 = vmatpush1.msra.mxu0 0.0
    %188 = vmatprep.subr.mxu0 0.0
    %189 = vmatpush1.msra.mxu0 0.0
    %190 = vmatprep.subr.mxu0 0.0
    %191 = vmatpush1.msra.mxu0 0.0
    %192 = vmatprep.subr.mxu0 0.0
    %193 = vmatpush1.msra.mxu0 0.0
    %194 = vmatprep.subr.mxu0 0.0
    %195 = vmatpush1.msra.mxu0 0.0
    %196 = vmatprep.subr.mxu0 0.0
    %197 = vmatpush1.msra.mxu0 0.0
    %198 = vmatprep.subr.mxu0 0.0
    %199 = vmatpush1.msra.mxu0 0.0
    %200 = vmatprep.mubr.f32.mxu0 0.0
    %201 = vmatmul.mubr.f32.gmra.mrb[0].mxu0 %v134
    %v202 = vpop.f32.mrb[0].mxu0
    %v203 = vadd.f32 0.0, %v202
    %v204 = vpop.f32.mrb[0].mxu0
    %205 = vdwg.mxu0
    %v206 = vld [vmem:[#allocation2] sm:$0x3]
    %v209 = vrot.slane %v203, 7
    %vm210 = vcmask 1041409
    %v211 = vsel %vm210, %v209, %v131
    %v213 = vadd.f32 %v206, %v211
    %vm214 = vcmask 254976
    %215 = vst.msk [vmem:[#allocation2] sm:$0x3] %vm214, %v213
    %v216 = vld [vmem:[#allocation3] sm:$0x3]
    %v217 = vld [vmem:[%s1] sm:$0x3]
    %v218 = vcvt.s32.f32 %v217
    %vm219 = vcmask 58368
    %v220 = vsel %vm219, %v218, 0.0
    %221 = vadd.xlane.f32.xlu0 %v220
    %v222 = vpop.xlane.xlu0 %221
    %v223 = vadd.f32 %v216, %v222
    %vm224 = vcmask 1024
    %225 = vst.msk [vmem:[#allocation3] sm:$0x3] %vm224, %v223
    // Predicated region
    $region18: #{tpu_custom_call.1} parent=1 // pred_check
      %p226 = pneg %p26
    $region19: #{tpu_custom_call.1} parent=1 // pred_check_branch
      %228 = sbr.rel (%p226) target = $region21
    $region20: #{tpu_custom_call.1} parent=1 // pred_region
      %v229 = vld [vmem:[#allocation3] sm:$0x3]
      %v230 = vmax.f32 %v229, 1e-09
      %v231 = vld [vmem:[#allocation2] sm:$0x3]
      %233 = vset.pattern.permute.xlu0 0
      %234 = vperm.xlu0 %233, %v230
      %v235 = vpop.permute.xlu0 %234
      %v237 = vrcp.pop %v235
      %v238 = vmul.f32 %v231, %v237
      %239 = vst.msk [vmem:[#allocation7] sm:$0x3] %vm214, %v238
    $region21: #{tpu_custom_call.1} parent=1 // pred_fallthru
      _
    // Predicated region
    $region22: #{tpu_custom_call.1} parent=1 // pred_check
      _
    $region23: #{tpu_custom_call.1} parent=1 // pred_check_branch
      %241 = sbr.rel (0) target = $region25
    $region24: #{tpu_custom_call.1} parent=1 // pred_region
      %s243 = ssub.s32 32, 32
      %244 = vsyncadd [#allocation6], %s243
      %s246 = sshll.u32 [#allocation7], 4
      %s247 = int_to_ptr.vmem [resolvable:$true] %s246
      %249 = dma.vmem_to_hbm [thread:$0]  %s247, 32, %s2, [#allocation6]
    $region25: #{tpu_custom_call.1} parent=1 // pred_fallthru
      _
    // Predicated region
    $region26: #{tpu_custom_call.1} parent=1 // pred_check
      _
    $region27: #{tpu_custom_call.1} parent=1 // pred_check_branch
      %251 = sbr.rel (0) target = $region29
    $region28: #{tpu_custom_call.1} parent=1 // pred_region
      %252 = dma.done [#allocation6], 32
    $region29: #{tpu_custom_call.1} parent=1 // pred_fallthru
      _
    %253 = vsyncpa [#allocation5], 1
    %254 = vsyncpa [#allocation6], 1

</llo_original>
